<compile_context>
chip_gen: v6e
topology: v6e:2x2x1
jax: 0.10.0
libtpu: 0.0.40
codegen_flags: <defaults>
</compile_context>

<pallas_src>
import functools

import jax
import jax.numpy as jnp
from jax.experimental import pallas as pl
from jax.experimental.pallas import tpu as pltpu


def _round_up(x, m):
    return ((x + m - 1) // m) * m


# ----------------------------------------------------------------------------
# Kernel 1: LightGCN propagation + layer mean  (AbstractModel.compute)
# ----------------------------------------------------------------------------
def _propagate_kernel(g_ref, e0_ref, out_ref, emb_ref, *, n_layers, tm, n):
    l = pl.program_id(0)          # layer index (outer, sequential)
    r = pl.program_id(1)          # row-tile index

    @pl.when((l == 0) & (r == 0))
    def _init():
        e0 = e0_ref[...]                       # (N, D) f32
        emb_ref[pl.ds(0, n), :] = e0           # ping buffer <- layer-0 embedding
        out_ref[...] = e0                      # layer-sum accumulator starts at e0

    src = pl.multiple_of((l % 2) * n, tm)      # half holding layer l
    row0 = pl.multiple_of(r * tm, tm)
    dst_row = pl.multiple_of((n - (l % 2) * n) + row0, tm)

    old = emb_ref[pl.ds(src, n), :]            # (N, D) f32, resident in VMEM
    # bf16 graph tile feeds the matmul directly (no explicit per-layer astype);
    # accumulation stays f32 on the MXU.
    new_rows = jnp.dot(g_ref[...], old,
                       preferred_element_type=jnp.float32)   # (TM, D) f32
    emb_ref[pl.ds(dst_row, tm), :] = new_rows

    acc_rows = out_ref[pl.ds(row0, tm), :] + new_rows
    inv = jnp.float32(1.0 / (n_layers + 1.0))  # Python-side constant reciprocal
    scale = jnp.where(l == n_layers - 1, inv, jnp.float32(1.0))
    out_ref[pl.ds(row0, tm), :] = acc_rows * scale


def lightgcn_compute(graph_bf16, all_emb0, n_layers, *, row_tile=None):
    """graph_bf16: (N, N) dense normalized adjacency (bf16); all_emb0: (N, D) f32."""
    N, D = all_emb0.shape
    assert graph_bf16.shape == (N, N)
    if n_layers == 0:
        # Empty grid would leave the output uninitialized; mean over {e0} is e0.
        return all_emb0.astype(jnp.float32)
    if row_tile is None:
        row_tile = N if N <= 256 else 256
    assert N % row_tile == 0 and row_tile % 8 == 0

    kernel = functools.partial(_propagate_kernel, n_layers=n_layers,
                               tm=row_tile, n=N)
    return pl.pallas_call(
        kernel,
        out_shape=jax.ShapeDtypeStruct((N, D), jnp.float32),
        grid_spec=pltpu.PrefetchScalarGridSpec(
            num_scalar_prefetch=0,
            grid=(n_layers, N // row_tile),
            in_specs=[
                # Graph row tile streams per grid step (double-buffered DMA).
                pl.BlockSpec((row_tile, N), lambda l, r: (r, 0)),
                # Layer-0 embedding: constant block, only consumed at (0, 0).
                pl.BlockSpec((N, D), lambda l, r: (0, 0)),
            ],
            # Constant index -> output block stays resident in VMEM as the
            # accumulator and is written back to HBM once at the end.
            out_specs=pl.BlockSpec((N, D), lambda l, r: (0, 0)),
            scratch_shapes=[
                pltpu.VMEM((2 * N, D), jnp.float32),   # ping-pong layer embeddings
            ],
        ),
        # Row tiles of layer l+1 need ALL row tiles of layer l via the resident
        # scratch, so both axes stay "arbitrary" (safe on megacore).
        compiler_params=pltpu.CompilerParams(
            dimension_semantics=("arbitrary", "arbitrary")),
    )(graph_bf16, all_emb0)


# ----------------------------------------------------------------------------
# Kernel 2: (optional L2-normalize) + users . items^T  (AbstractModel.predict)
# ----------------------------------------------------------------------------
def _predict_kernel(u_ref, i_ref, out_ref, *, pred_norm):
    u = u_ref[...]                  # (TU, D) f32
    it = i_ref[...]                 # (TI, D) f32
    if pred_norm:
        # F.normalize(x, dim=-1); elementwise math kept in f32 (v5e-safe).
        u = u * jax.lax.rsqrt(jnp.sum(u * u, axis=-1, keepdims=True) + 1e-24)
        it = it * jax.lax.rsqrt(jnp.sum(it * it, axis=-1, keepdims=True) + 1e-24)
    # Contract dim 1 with dim 1 directly (no .T -> no XLU transpose/relayout).
    out_ref[...] = jax.lax.dot_general(
        u, it, dimension_numbers=(((1,), (1,)), ((), ())),
        preferred_element_type=jnp.float32)


def lightgcn_predict_scores(users_emb, items_emb, pred_norm):
    """users_emb: (U, D), items_emb: (I, D) -> (U, I) f32 score matrix."""
    U, D = users_emb.shape
    I, _ = items_emb.shape
    ti = 128                                     # lane-dense output tiles
    tu = 128 if U >= 128 else _round_up(U, 8)
    u_pad = _round_up(U, tu)
    i_pad = _round_up(I, ti)
    u_p = jnp.zeros((u_pad, D), jnp.float32).at[:U].set(users_emb.astype(jnp.float32))
    i_p = jnp.zeros((i_pad, D), jnp.float32).at[:I].set(items_emb.astype(jnp.float32))

    out = pl.pallas_call(
        functools.partial(_predict_kernel, pred_norm=pred_norm),
        out_shape=jax.ShapeDtypeStruct((u_pad, i_pad), jnp.float32),
        grid_spec=pltpu.PrefetchScalarGridSpec(
            num_scalar_prefetch=0,
            grid=(u_pad // tu, i_pad // ti),
            in_specs=[
                pl.BlockSpec((tu, D), lambda iu, ii: (iu, 0)),
                pl.BlockSpec((ti, D), lambda iu, ii: (ii, 0)),
            ],
            out_specs=pl.BlockSpec((tu, ti), lambda iu, ii: (iu, ii)),
        ),
        compiler_params=pltpu.CompilerParams(
            dimension_semantics=("parallel", "parallel")),
    )(u_p, i_p)
    return out[:U, :I]


# ----------------------------------------------------------------------------
# Model wrapper (parameter setup / gathers = plain JAX glue)
# ----------------------------------------------------------------------------
class AbstractModelPallas:
    def __init__(self, n_users, n_items, emb_dim, n_layers, pred_norm, key,
                 row_tile=None):
        self.n_users = n_users
        self.n_items = n_items
        self.emb_dim = emb_dim
        self.n_layers = n_layers
        self.pred_norm = pred_norm
        self.row_tile = row_tile

        ku, ki, kg = jax.random.split(key, 3)
        # xavier_normal_: std = sqrt(2 / (fan_in + fan_out))
        std_u = (2.0 / (n_users + emb_dim)) ** 0.5
        std_i = (2.0 / (n_items + emb_dim)) ** 0.5
        self.embed_user = std_u * jax.random.normal(ku, (n_users, emb_dim), jnp.float32)
        self.embed_item = std_i * jax.random.normal(ki, (n_items, emb_dim), jnp.float32)

        # Deterministic synthetic bipartite interaction matrix R (n_users, n_items),
        # then LightGCN normalized adjacency: A_hat = D^-1/2 [[0,R],[R^T,0]] D^-1/2.
        # Stored in bf16: halves the O(N^2) HBM traffic / VMEM footprint and the
        # MXU consumes bf16 natively.
        R = (jax.random.uniform(kg, (n_users, n_items)) < 0.15).astype(jnp.float32)
        N = n_users + n_items
        A = jnp.zeros((N, N), jnp.float32)
        A = A.at[:n_users, n_users:].set(R)
        A = A.at[n_users:, :n_users].set(R.T)
        deg = jnp.sum(A, axis=1)
        d_inv_sqrt = jnp.where(deg > 0, 1.0 / jnp.sqrt(jnp.maximum(deg, 1e-12)), 0.0)
        self.graph = (A * d_inv_sqrt[:, None] * d_inv_sqrt[None, :]).astype(jnp.bfloat16)

    def compute(self):
        all_emb0 = jnp.concatenate([self.embed_user, self.embed_item], axis=0)
        light_out = lightgcn_compute(self.graph, all_emb0, self.n_layers,
                                     row_tile=self.row_tile)
        users = light_out[: self.n_users]
        items = light_out[self.n_users:]
        return users, items

    def predict(self, user_ids, item_ids=None):
        if item_ids is None:
            item_ids = jnp.arange(self.n_items, dtype=jnp.int32)
        all_users, all_items = self.compute()
        # TODO(synk): fuse this row gather into the predict kernel via scalar-
        # prefetched ids + pl.Element row-gather BlockSpecs to skip one HBM
        # round trip for large candidate sets.
        u = all_users[jnp.asarray(user_ids, jnp.int32)]
        it = all_items[jnp.asarray(item_ids, jnp.int32)]
        return lightgcn_predict_scores(u, it, self.pred_norm)


# ----------------------------------------------------------------------------
# Reference (pure JAX) for verification — uses the same bf16-valued graph.
# ----------------------------------------------------------------------------
def _reference_predict(model, user_ids, item_ids=None):
    if item_ids is None:
        item_ids = jnp.arange(model.n_items, dtype=jnp.int32)
    all_emb = jnp.concatenate([model.embed_user, model.embed_item], axis=0)
    g = model.graph.astype(jnp.float32)
    embs = [all_emb]
    e = all_emb
    for _ in range(model.n_layers):
        e = jnp.matmul(g, e, precision=jax.lax.Precision.HIGHEST)
        embs.append(e)
    light_out = jnp.mean(jnp.stack(embs, axis=1), axis=1)
    users = light_out[: model.n_users][jnp.asarray(user_ids, jnp.int32)]
    items = light_out[model.n_users:][jnp.asarray(item_ids, jnp.int32)]
    if model.pred_norm:
        users = users / jnp.maximum(
            jnp.linalg.norm(users, axis=-1, keepdims=True), 1e-12)
        items = items / jnp.maximum(
            jnp.linalg.norm(items, axis=-1, keepdims=True), 1e-12)
    return jnp.matmul(users, items.T, precision=jax.lax.Precision.HIGHEST)


if __name__ == "__main__":
    key = jax.random.PRNGKey(0)

    n_users, n_items = 48, 80          # N = 128 total graph nodes
    emb_dim = 64                       # lane-friendlier than 32 (MXU/store fill)
    n_layers = 2
    pred_norm = True

    model = AbstractModelPallas(n_users, n_items, emb_dim, n_layers, pred_norm,
                                key, row_tile=64)   # 2 row tiles -> exercises tiling

    # compute() via Pallas propagation kernel
    users_all, items_all = model.compute()
    jax.block_until_ready(users_all)
    jax.block_until_ready(items_all)

    # predict() via Pallas normalize+matmul kernel
    query_users = jnp.array([0, 3, 5, 7, 11, 13, 17, 19], dtype=jnp.int32)
    scores = model.predict(query_users)           # (8, 80)
    jax.block_until_ready(scores)

    ref = _reference_predict(model, query_users)
    assert scores.shape == (query_users.shape[0], n_items)
    max_err = float(jnp.max(jnp.abs(scores - ref)))
    assert jnp.allclose(scores, ref, atol=2e-3, rtol=2e-3), max_err

    print("KERNEL_OK")
</pallas_src>

<mosaic_0001>
module attributes {stable_mosaic.version = 11 : i64} {
  func.func @_propagate_kernel(%arg0: i32, %arg1: i32, %arg2: memref<64x128xbf16, #tpu.memory_space<vmem>>, %arg3: memref<128x64xf32, #tpu.memory_space<vmem>>, %arg4: memref<128x64xf32, #tpu.memory_space<vmem>>, %arg5: memref<256x64xf32, #tpu.memory_space<vmem>>) attributes {dimension_semantics = [#tpu.dimension_semantics<arbitrary>, #tpu.dimension_semantics<arbitrary>], iteration_bounds = array<i64: 2, 2>, scalar_prefetch = 0 : i64, scratch_operands = 1 : i64, tpu.core_type = #tpu.core_type<tc>, window_params = [{transform_indices = @transform_0, window_bounds = array<i64: 64, 128>}, {pipeline_mode = #tpu.pipeline_mode<synchronous>, transform_indices = @transform_1, window_bounds = array<i64: 128, 64>}, {pipeline_mode = #tpu.pipeline_mode<synchronous>, transform_indices = @transform_2, window_bounds = array<i64: 128, 64>}]} {
    %c0_i32 = arith.constant 0 : i32
    %0 = arith.cmpi eq, %arg0, %c0_i32 : i32
    %c0_i32_0 = arith.constant 0 : i32
    %1 = arith.cmpi eq, %arg1, %c0_i32_0 : i32
    %2 = arith.andi %0, %1 : i1
    %3 = arith.extui %2 : i1 to i32
    %c0_i32_1 = arith.constant 0 : i32
    %4 = arith.cmpi ne, %3, %c0_i32_1 : i32
    scf.if %4 {
      %c0_22 = arith.constant 0 : index
      %c0_23 = arith.constant 0 : index
      %48 = vector.load %arg3[%c0_22, %c0_23] : memref<128x64xf32, #tpu.memory_space<vmem>>, vector<128x64xf32>
      %c0_24 = arith.constant 0 : index
      %c0_25 = arith.constant 0 : index
      %49 = vector.load %arg5[%c0_24, %c0_25] : memref<256x64xf32, #tpu.memory_space<vmem>>, vector<128x64xf32>
      tpu.vector_store %arg5[%c0_24, %c0_25], %48 {strides = array<i32>} : memref<256x64xf32, #tpu.memory_space<vmem>>, vector<128x64xf32>,
      %c0_26 = arith.constant 0 : index
      %c0_27 = arith.constant 0 : index
      %50 = vector.load %arg4[%c0_26, %c0_27] : memref<128x64xf32, #tpu.memory_space<vmem>>, vector<128x64xf32>
      tpu.vector_store %arg4[%c0_26, %c0_27], %48 {strides = array<i32>} : memref<128x64xf32, #tpu.memory_space<vmem>>, vector<128x64xf32>,
    } else {
    }
    %c2_i32 = arith.constant 2 : i32
    %c0_i32_2 = arith.constant 0 : i32
    %5 = arith.cmpi eq, %c2_i32, %c0_i32_2 : i32
    %c1_i32 = arith.constant 1 : i32
    %6 = arith.select %5, %c1_i32, %c2_i32 : i32
    %7 = arith.remsi %arg0, %6 : i32
    %c0_i32_3 = arith.constant 0 : i32
    %8 = arith.cmpi ne, %7, %c0_i32_3 : i32
    %c0_i32_4 = arith.constant 0 : i32
    %9 = arith.cmpi slt, %7, %c0_i32_4 : i32
    %c0_i32_5 = arith.constant 0 : i32
    %10 = arith.cmpi slt, %6, %c0_i32_5 : i32
    %11 = arith.xori %9, %10 : i1
    %12 = arith.andi %11, %8 : i1
    %13 = arith.addi %7, %6 : i32
    %14 = arith.select %12, %13, %7 : i32
    %c128_i32 = arith.constant 128 : i32
    %15 = arith.muli %14, %c128_i32 : i32
    %16 = tpu.assume_multiple %15, 64 : i32
    %c64_i32 = arith.constant 64 : i32
    %17 = arith.muli %arg1, %c64_i32 : i32
    %18 = tpu.assume_multiple %17, 64 : i32
    %c2_i32_6 = arith.constant 2 : i32
    %c0_i32_7 = arith.constant 0 : i32
    %19 = arith.cmpi eq, %c2_i32_6, %c0_i32_7 : i32
    %c1_i32_8 = arith.constant 1 : i32
    %20 = arith.select %19, %c1_i32_8, %c2_i32_6 : i32
    %21 = arith.remsi %arg0, %20 : i32
    %c0_i32_9 = arith.constant 0 : i32
    %22 = arith.cmpi ne, %21, %c0_i32_9 : i32
    %c0_i32_10 = arith.constant 0 : i32
    %23 = arith.cmpi slt, %21, %c0_i32_10 : i32
    %c0_i32_11 = arith.constant 0 : i32
    %24 = arith.cmpi slt, %20, %c0_i32_11 : i32
    %25 = arith.xori %23, %24 : i1
    %26 = arith.andi %25, %22 : i1
    %27 = arith.addi %21, %20 : i32
    %28 = arith.select %26, %27, %21 : i32
    %c128_i32_12 = arith.constant 128 : i32
    %29 = arith.muli %28, %c128_i32_12 : i32
    %c128_i32_13 = arith.constant 128 : i32
    %30 = arith.subi %c128_i32_13, %29 : i32
    %31 = arith.addi %30, %18 : i32
    %32 = tpu.assume_multiple %31, 64 : i32
    %33 = arith.index_cast %16 : i32 to index
    %c0 = arith.constant 0 : index
    %34 = vector.load %arg5[%33, %c0] : memref<256x64xf32, #tpu.memory_space<vmem>>, vector<128x64xf32>
    %c0_14 = arith.constant 0 : index
    %c0_15 = arith.constant 0 : index
    %35 = vector.load %arg2[%c0_14, %c0_15] : memref<64x128xbf16, #tpu.memory_space<vmem>>, vector<64x128xbf16>
    %cst = arith.constant dense<0.000000e+00> : vector<64x64xf32>
    %36 = tpu.matmul %35, %34, %cst {dimension_numbers = #tpu.dot_dimension_numbers<[1], [0], [0], [1], [0, 0, 1, 1], [], []>} : vector<64x128xbf16>, vector<128x64xf32>, vector<64x64xf32> -> vector<64x64xf32>
    %37 = arith.index_cast %32 : i32 to index
    %c0_16 = arith.constant 0 : index
    %38 = vector.load %arg5[%37, %c0_16] : memref<256x64xf32, #tpu.memory_space<vmem>>, vector<64x64xf32>
    tpu.vector_store %arg5[%37, %c0_16], %36 {strides = array<i32>} : memref<256x64xf32, #tpu.memory_space<vmem>>, vector<64x64xf32>,
    %39 = arith.index_cast %18 : i32 to index
    %c0_17 = arith.constant 0 : index
    %40 = vector.load %arg4[%39, %c0_17] : memref<128x64xf32, #tpu.memory_space<vmem>>, vector<64x64xf32>
    %41 = arith.addf %40, %36 : vector<64x64xf32>
    %c1_i32_18 = arith.constant 1 : i32
    %42 = arith.cmpi eq, %arg0, %c1_i32_18 : i32
    %cst_19 = arith.constant 0.333333343 : f32
    %cst_20 = arith.constant 1.000000e+00 : f32
    %43 = arith.select %42, %cst_19, %cst_20 : f32
    %44 = vector.broadcast %43 : f32 to vector<64x64xf32>
    %45 = arith.mulf %41, %44 : vector<64x64xf32>
    %46 = arith.index_cast %18 : i32 to index
    %c0_21 = arith.constant 0 : index
    %47 = vector.load %arg4[%46, %c0_21] : memref<128x64xf32, #tpu.memory_space<vmem>>, vector<64x64xf32>
    tpu.vector_store %arg4[%46, %c0_21], %45 {strides = array<i32>} : memref<128x64xf32, #tpu.memory_space<vmem>>, vector<64x64xf32>,
    return
  }
  func.func @transform_0(%arg0: i32, %arg1: i32) -> (i32, i32) {
    %c0_i32 = arith.constant 0 : i32
    %c0_i32_0 = arith.constant 0 : i32
    return %arg1, %c0_i32 : i32, i32
  }
  func.func @transform_1(%arg0: i32, %arg1: i32) -> (i32, i32) {
    %c0_i32 = arith.constant 0 : i32
    %c0_i32_0 = arith.constant 0 : i32
    %c0_i32_1 = arith.constant 0 : i32
    return %c0_i32, %c0_i32_0 : i32, i32
  }
  func.func @transform_2(%arg0: i32, %arg1: i32) -> (i32, i32) {
    %c0_i32 = arith.constant 0 : i32
    %c0_i32_0 = arith.constant 0 : i32
    %c0_i32_1 = arith.constant 0 : i32
    return %c0_i32, %c0_i32_0 : i32, i32
  }
}

</mosaic_0001>

<llo_original>
// kernel: tpu_custom_call.1
$region0: #{tpu_custom_call.1}
  #allocation0 [shape = 'u32[]', space=smem, size = 0x4, offset = 0x4, fixed_abs, tag = 'smem constant byte address 0x4 - core index']
  #allocation1 [shape = 'u32[144,128]{1,0:T(1,128)}', space=vmem, size = 0x12000, scoped, tag = 'internal scratch']
  #allocation2 [shape = 'f32[256,64]{1,0:T(8,128)}', space=vmem, size = 0x20000, scoped, tag = 'scratch operand']
  %s0 = inlined_call_operand.vmem [shape: bf16[128,128], index: 0, kind: input, shape index: {}]
  %s1 = inlined_call_operand.vmem [shape: f32[128,64], index: 1, kind: input, shape index: {}]
  %s2 = inlined_call_operand.vmem [shape: f32[128,64], index: 2, kind: output, shape index: {}]
  %s3 = sld [smem:[#allocation0]]
  $region45: #{tpu_custom_call.1} parent=0
    _
  %s5 = ssub.s32 1, %s3
  %s6 = scalar_select 0, %s5, %s3
  loop: start=0, step=1, limit=6
  $region2: #{tpu_custom_call.1} parent=0 // loop_pre_header
    _
  $region3: #{tpu_custom_call.1} parent=0 // loop_header
    %s8 = sphi 0, %s12
    %p9 = scmp.ge.s32.totalorder %s8, 6
    %s15 = sphi 0, %s27
    %s16 = sphi 0, %s23
    %s17 = sphi 0, %s15
    %s18 = sphi 0, %s16
    %s19 = sphi 0, %s17
    %s20 = sphi 0, %s18
    %s30 = sphi 0, %s32
    %s33 = sphi 0, %s30
    %s34 = sphi 0, %s33
    %s50 = sphi 0, %s34
    %s54 = sphi 0, %s54
    %s56 = sphi 0, %s54
    %s57 = sphi 0, %s56
    %s71 = sphi 0, %s57
    %s75 = sphi 0, %s75
    %s77 = sphi 0, %s75
    %s78 = sphi 0, %s77
    %s92 = sphi 0, %s78
  $region4: #{tpu_custom_call.1} parent=0 // loop_header_branch
    %11 = sbr.rel (%p9) target = $region8
  $region5: #{tpu_custom_call.1} parent=0 // loop_body
    %s13 = ssub.s32 %s8, 1
    %s14 = ssub.s32 %s8, 2
    %s21 = sadd.s32 1, %s16
    %p22 = scmp.ge.s32.totalorder %s21, 2
    %s23 = scalar_select %p22, 0, %s21
    %s24 = sadd.s32 1, %s15
    %s25 = scalar_select %p22, %s24, %s15
    %p26 = scmp.ge.s32.totalorder %s25, 2
    %s27 = scalar_select %p26, 0, %s25
    %s28 = ssub.s32 %s16, %s23
    %p29 = scmp.eq.s32.totalorder %s28, 0
    %s31 = sadd.s32 %s30, 1
    %s32 = scalar_select %p29, %s30, %s31
    %p35 = pneg %p29
    %p36 = scmp.eq.s32.totalorder %s8, 3
    %p37 = por %p35, %p36
    %p38 = scmp.ne.s32.totalorder %s30, %s33
    %p39 = scmp.eq.s32.totalorder %s8, 0
    %p40 = por %p38, %p39
    %p41 = scmp.ne.s32.totalorder %s30, %s33
    %p42 = scmp.eq.s32.totalorder %s13, 3
    %p43 = por %p41, %p42
    %p44 = scmp.ne.s32.totalorder %s33, %s34
    %p45 = scmp.eq.s32.totalorder %s13, 0
    %p46 = por %p44, %p45
    %p47 = scmp.ne.s32.totalorder %s33, %s34
    %p48 = scmp.eq.s32.totalorder %s14, 3
    %p49 = por %p47, %p48
    %p51 = scmp.ne.s32.totalorder %s34, %s50
    %p52 = scmp.eq.s32.totalorder %s14, 0
    %p53 = por %p51, %p52
    %s55 = sadd.s32 %s54, 1
    %p58 = scmp.eq.s32.totalorder %s8, 3
    %p59 = scmp.ne.s32.totalorder %s54, %s56
    %p60 = scmp.eq.s32.totalorder %s8, 0
    %p61 = por %p59, %p60
    %p62 = scmp.ne.s32.totalorder %s54, %s56
    %p63 = scmp.eq.s32.totalorder %s13, 3
    %p64 = por %p62, %p63
    %p65 = scmp.ne.s32.totalorder %s56, %s57
    %p66 = scmp.eq.s32.totalorder %s13, 0
    %p67 = por %p65, %p66
    %p68 = scmp.ne.s32.totalorder %s56, %s57
    %p69 = scmp.eq.s32.totalorder %s14, 3
    %p70 = por %p68, %p69
    %p72 = scmp.ne.s32.totalorder %s57, %s71
    %p73 = scmp.eq.s32.totalorder %s14, 0
    %p74 = por %p72, %p73
    %s76 = sadd.s32 %s75, 1
    %p79 = scmp.eq.s32.totalorder %s8, 3
    %p80 = scmp.ne.s32.totalorder %s75, %s77
    %p81 = scmp.eq.s32.totalorder %s8, 0
    %p82 = por %p80, %p81
    %p83 = scmp.ne.s32.totalorder %s75, %s77
    %p84 = scmp.eq.s32.totalorder %s13, 3
    %p85 = por %p83, %p84
    %p86 = scmp.ne.s32.totalorder %s77, %s78
    %p87 = scmp.eq.s32.totalorder %s13, 0
    %p88 = por %p86, %p87
    %p89 = scmp.ne.s32.totalorder %s77, %s78
    %p90 = scmp.eq.s32.totalorder %s14, 3
    %p91 = por %p89, %p90
    %p93 = scmp.ne.s32.totalorder %s78, %s92
    %p94 = scmp.eq.s32.totalorder %s14, 0
    %p95 = por %p93, %p94
    %p96 = scmp.le.s32.totalorder 1, %s8
    %p97 = scmp.lt.s32.totalorder %s8, 5
    %p98 = pnand %p96, %p97
    %p99 = pneg %p98
    // Predicated region
    $region9: #{tpu_custom_call.1} parent=5 // pred_check
      _
    $region10: #{tpu_custom_call.1} parent=5 // pred_check_branch
      %101 = sbr.rel (%p98) target = $region12
    $region11: #{tpu_custom_call.1} parent=5 // pred_region
      %s102 = ssub.s32 %s8, 1
      // Predicated region
      $region13: #{tpu_custom_call.1} parent=11 // pred_check
        %p103 = pneg %p67
      $region14: #{tpu_custom_call.1} parent=11 // pred_check_branch
        %105 = sbr.rel (%p103) target = $region16
      $region15: #{tpu_custom_call.1} parent=11 // pred_region
        _
      $region16: #{tpu_custom_call.1} parent=11 // pred_fallthru
        _
    $region12: #{tpu_custom_call.1} parent=5 // pred_fallthru
      _
    %p106 = scmp.lt.s32.totalorder %s8, 4
    // Predicated region
    $region17: #{tpu_custom_call.1} parent=5 // pred_check
      %p107 = pneg %p106
    $region18: #{tpu_custom_call.1} parent=5 // pred_check_branch
      %109 = sbr.rel (%p107) target = $region20
    $region19: #{tpu_custom_call.1} parent=5 // pred_region
      // Predicated region
      $region21: #{tpu_custom_call.1} parent=19 // pred_check
        %p110 = pneg %p40
      $region22: #{tpu_custom_call.1} parent=19 // pred_check_branch
        %112 = sbr.rel (%p110) target = $region24
      $region23: #{tpu_custom_call.1} parent=19 // pred_region
        %s113 = smul.u32 8, %s16
        %p114 = scmp.lt.s32.totalorder %s113, 15
        %s115 = scalar_select %p114, %s113, 15
        %s116 = smul.addr %s115, 4
        %s117 = scalar_lea.vmem %s0, %s116
        %s118 = smul.u32 8, %s16
      $region24: #{tpu_custom_call.1} parent=19 // pred_fallthru
        _
    $region20: #{tpu_custom_call.1} parent=5 // pred_fallthru
      _
    %p119 = scmp.le.s32.totalorder 1, %s8
    %p120 = scmp.lt.s32.totalorder %s8, 5
    %p121 = pnand %p119, %p120
    %p122 = pneg %p121
    // Predicated region
    $region25: #{tpu_custom_call.1} parent=5 // pred_check
      _
    $region26: #{tpu_custom_call.1} parent=5 // pred_check_branch
      %124 = sbr.rel (%p121) target = $region28
    $region27: #{tpu_custom_call.1} parent=5 // pred_region
      %s125 = ssub.s32 %s8, 1
      %s126 = smul.u32 8, %s18
      %p127 = scmp.lt.s32.totalorder %s126, 15
      %s128 = scalar_select %p127, %s126, 15
      %s129 = smul.addr %s128, 4
      %s130 = scalar_lea.vmem %s0, %s129
      %p131 = pneg %p46
      %p132 = pneg %p43
      %p133 = pneg %p67
      %p134 = pneg %p64
      %p135 = pneg %p88
      %p136 = pneg %p85
      %s137 = smul.u32 8, %s18
      %p138 = scmp.lt.s32.totalorder %s137, 15
      %s139 = scalar_select %p138, %s137, 15
      %s140 = smul.addr %s139, 4
      %s141 = scalar_lea.vmem %s0, %s140
      %s142 = smul.u32 8, %s18
      %p144 = scmp.eq.s32.totalorder %s17, 0
      %p145 = scmp.eq.s32.totalorder %s18, 0
      %p146 = pnand %p144, %p145
      %p147 = pneg %p146
      // Predicated region
      $region29: #{tpu_custom_call.1} parent=27 // pred_check
        _
      $region30: #{tpu_custom_call.1} parent=27 // pred_check_branch
        %149 = sbr.rel (%p146) target = $region32
      $region31: #{tpu_custom_call.1} parent=27 // pred_region
        %v150 = vld [vmem:[%s1] sm:$0xff]
        %v151 = vld [vmem:[%s1 + $0x8] sm:$0xff]
        %v152 = vld [vmem:[%s1 + $0x10] sm:$0xff]
        %v153 = vld [vmem:[%s1 + $0x18] sm:$0xff]
        %v154 = vld [vmem:[%s1 + $0x20] sm:$0xff]
        %v155 = vld [vmem:[%s1 + $0x28] sm:$0xff]
        %v156 = vld [vmem:[%s1 + $0x30] sm:$0xff]
        %v157 = vld [vmem:[%s1 + $0x38] sm:$0xff]
        %v158 = vld [vmem:[%s1 + $0x40] sm:$0xff]
        %v159 = vld [vmem:[%s1 + $0x48] sm:$0xff]
        %v160 = vld [vmem:[%s1 + $0x50] sm:$0xff]
        %v161 = vld [vmem:[%s1 + $0x58] sm:$0xff]
        %v162 = vld [vmem:[%s1 + $0x60] sm:$0xff]
        %v163 = vld [vmem:[%s1 + $0x68] sm:$0xff]
        %v164 = vld [vmem:[%s1 + $0x70] sm:$0xff]
        %v165 = vld [vmem:[%s1 + $0x78] sm:$0xff]
        %vm166 = vcmask 523264
        %167 = vst.msk [vmem:[#allocation2] sm:$0xff] %vm166, %v150
        %168 = vst.msk [vmem:[#allocation2 + $0x8] sm:$0xff] %vm166, %v151
        %169 = vst.msk [vmem:[#allocation2 + $0x10] sm:$0xff] %vm166, %v152
        %170 = vst.msk [vmem:[#allocation2 + $0x18] sm:$0xff] %vm166, %v153
        %171 = vst.msk [vmem:[#allocation2 + $0x20] sm:$0xff] %vm166, %v154
        %172 = vst.msk [vmem:[#allocation2 + $0x28] sm:$0xff] %vm166, %v155
        %173 = vst.msk [vmem:[#allocation2 + $0x30] sm:$0xff] %vm166, %v156
        %174 = vst.msk [vmem:[#allocation2 + $0x38] sm:$0xff] %vm166, %v157
        %175 = vst.msk [vmem:[#allocation2 + $0x40] sm:$0xff] %vm166, %v158
        %176 = vst.msk [vmem:[#allocation2 + $0x48] sm:$0xff] %vm166, %v159
        %177 = vst.msk [vmem:[#allocation2 + $0x50] sm:$0xff] %vm166, %v160
        %178 = vst.msk [vmem:[#allocation2 + $0x58] sm:$0xff] %vm166, %v161
        %179 = vst.msk [vmem:[#allocation2 + $0x60] sm:$0xff] %vm166, %v162
        %180 = vst.msk [vmem:[#allocation2 + $0x68] sm:$0xff] %vm166, %v163
        %181 = vst.msk [vmem:[#allocation2 + $0x70] sm:$0xff] %vm166, %v164
        %182 = vst.msk [vmem:[#allocation2 + $0x78] sm:$0xff] %vm166, %v165
        %183 = vst.msk [vmem:[%s2] sm:$0xff] %vm166, %v150
        %184 = vst.msk [vmem:[%s2 + $0x8] sm:$0xff] %vm166, %v151
        %185 = vst.msk [vmem:[%s2 + $0x10] sm:$0xff] %vm166, %v152
        %186 = vst.msk [vmem:[%s2 + $0x18] sm:$0xff] %vm166, %v153
        %187 = vst.msk [vmem:[%s2 + $0x20] sm:$0xff] %vm166, %v154
        %188 = vst.msk [vmem:[%s2 + $0x28] sm:$0xff] %vm166, %v155
        %189 = vst.msk [vmem:[%s2 + $0x30] sm:$0xff] %vm166, %v156
        %190 = vst.msk [vmem:[%s2 + $0x38] sm:$0xff] %vm166, %v157
        %191 = vst.msk [vmem:[%s2 + $0x40] sm:$0xff] %vm166, %v158
        %192 = vst.msk [vmem:[%s2 + $0x48] sm:$0xff] %vm166, %v159
        %193 = vst.msk [vmem:[%s2 + $0x50] sm:$0xff] %vm166, %v160
        %194 = vst.msk [vmem:[%s2 + $0x58] sm:$0xff] %vm166, %v161
        %195 = vst.msk [vmem:[%s2 + $0x60] sm:$0xff] %vm166, %v162
        %196 = vst.msk [vmem:[%s2 + $0x68] sm:$0xff] %vm166, %v163
        %197 = vst.msk [vmem:[%s2 + $0x70] sm:$0xff] %vm166, %v164
        %198 = vst.msk [vmem:[%s2 + $0x78] sm:$0xff] %vm166, %v165
      $region32: #{tpu_custom_call.1} parent=27 // pred_fallthru
        _
      %p199 = scmp.lt.s32.totalorder %s17, 0
      %s200 = ssub.s32 0, %s17
      %s201 = scalar_select %p199, %s200, %s17
      %s202 = sand.u32 %s201, 1
      %s203 = ssub.s32 0, %s202
      %s204 = scalar_select %p199, %s203, %s202
      %p205 = scmp.ne.s32.totalorder %s204, 0
      %p206 = scmp.lt.s32.totalorder %s204, 0
      %p207 = pnand %p206, %p205
      %p208 = pneg %p207
      %s209 = sadd.s32 %s204, 2
      %s210 = scalar_select %p208, %s209, %s204
      %s211 = smul.u32 %s210, 128
      %s212 = smul.u32 %s18, 64
      %s213 = ssub.s32 128, %s211
      %s214 = sadd.s32 %s213, %s212
      %s215 = scalar_lea.vmem [#allocation2], %s211
      %v216 = vld [vmem:[%s215] sm:$0xff]
      %v217 = vld [vmem:[%s215 + $0x8] sm:$0xff]
      %v218 = vld [vmem:[%s215 + $0x10] sm:$0xff]
      %v219 = vld [vmem:[%s215 + $0x18] sm:$0xff]
      %v220 = vld [vmem:[%s215 + $0x20] sm:$0xff]
      %v221 = vld [vmem:[%s215 + $0x28] sm:$0xff]
      %v222 = vld [vmem:[%s215 + $0x30] sm:$0xff]
      %v223 = vld [vmem:[%s215 + $0x38] sm:$0xff]
      %v224 = vld [vmem:[%s215 + $0x40] sm:$0xff]
      %v225 = vld [vmem:[%s215 + $0x48] sm:$0xff]
      %v226 = vld [vmem:[%s215 + $0x50] sm:$0xff]
      %v227 = vld [vmem:[%s215 + $0x58] sm:$0xff]
      %v228 = vld [vmem:[%s215 + $0x60] sm:$0xff]
      %v229 = vld [vmem:[%s215 + $0x68] sm:$0xff]
      %v230 = vld [vmem:[%s215 + $0x70] sm:$0xff]
      %v231 = vld [vmem:[%s215 + $0x78] sm:$0xff]
      %v232 = vld [vmem:[%s141] sm:$0xf]
      %v233 = vld [vmem:[%s141 + $0x4] sm:$0xf]
      %v234 = vld [vmem:[%s141 + $0x8] sm:$0xf]
      %v235 = vld [vmem:[%s141 + $0xc] sm:$0xf]
      %v236 = vld [vmem:[%s141 + $0x10] sm:$0xf]
      %v237 = vld [vmem:[%s141 + $0x14] sm:$0xf]
      %v238 = vld [vmem:[%s141 + $0x18] sm:$0xf]
      %v239 = vld [vmem:[%s141 + $0x1c] sm:$0xf]
      %v248 = vunpack.c.l.b16 %v232
      %v249 = vunpack.c.l.b16 %v233
      %v250 = vunpack.c.l.b16 %v234
      %v251 = vunpack.c.l.b16 %v235
      %v252 = vunpack.c.l.b16 %v236
      %v253 = vunpack.c.l.b16 %v237
      %v254 = vunpack.c.l.b16 %v238
      %v255 = vunpack.c.l.b16 %v239
      %v256 = vpack.c.b16 %v249, %v248
      %v257 = vpack.c.b16 %v251, %v250
      %v258 = vpack.c.b16 %v253, %v252
      %v259 = vpack.c.b16 %v255, %v254
      %264 = vmatprep.subr.mxu0 0.0
      %265 = vmatpush1.msra.mxu0 %v231
      %266 = vmatprep.subr.mxu0 0.0
      %267 = vmatpush1.msra.mxu0 %v230
      %268 = vmatprep.subr.mxu0 0.0
      %269 = vmatpush1.msra.mxu0 %v229
      %270 = vmatprep.subr.mxu0 0.0
      %271 = vmatpush1.msra.mxu0 %v228
      %272 = vmatprep.subr.mxu0 0.0
      %273 = vmatpush1.msra.mxu0 %v227
      %274 = vmatprep.subr.mxu0 0.0
      %275 = vmatpush1.msra.mxu0 %v226
      %276 = vmatprep.subr.mxu0 0.0
      %277 = vmatpush1.msra.mxu0 %v225
      %278 = vmatprep.subr.mxu0 0.0
      %279 = vmatpush1.msra.mxu0 %v224
      %280 = vmatprep.subr.mxu0 0.0
      %281 = vmatpush1.msra.mxu0 %v223
      %282 = vmatprep.subr.mxu0 0.0
      %283 = vmatpush1.msra.mxu0 %v222
      %284 = vmatprep.subr.mxu0 0.0
      %285 = vmatpush1.msra.mxu0 %v221
      %286 = vmatprep.subr.mxu0 0.0
      %287 = vmatpush1.msra.mxu0 %v220
      %288 = vmatprep.subr.mxu0 0.0
      %289 = vmatpush1.msra.mxu0 %v219
      %290 = vmatprep.subr.mxu0 0.0
      %291 = vmatpush1.msra.mxu0 %v218
      %292 = vmatprep.subr.mxu0 0.0
      %293 = vmatpush1.msra.mxu0 %v217
      %294 = vmatprep.subr.mxu0 0.0
      %295 = vmatpush1.msra.mxu0 %v216
      %296 = vmatprep.subr.mxu0 0.0
      %297 = vmatpush2.msra.mxu0 0.0
      %298 = vmatprep.subr.mxu0 0.0
      %299 = vmatpush2.msra.mxu0 0.0
      %300 = vmatprep.subr.mxu0 0.0
      %301 = vmatpush2.msra.mxu0 0.0
      %302 = vmatprep.subr.mxu0 0.0
      %303 = vmatpush2.msra.mxu0 0.0
      %304 = vmatprep.subr.mxu0 0.0
      %305 = vmatpush2.msra.mxu0 0.0
      %306 = vmatprep.subr.mxu0 0.0
      %307 = vmatpush2.msra.mxu0 0.0
      %308 = vmatprep.subr.mxu0 0.0
      %309 = vmatpush2.msra.mxu0 0.0
      %310 = vmatprep.subr.mxu0 0.0
      %311 = vmatpush2.msra.mxu0 0.0
      %312 = vmatprep.subr.mxu0 0.0
      %313 = vmatpush2.msra.mxu0 0.0
      %314 = vmatprep.subr.mxu0 0.0
      %315 = vmatpush2.msra.mxu0 0.0
      %316 = vmatprep.subr.mxu0 0.0
      %317 = vmatpush2.msra.mxu0 0.0
      %318 = vmatprep.subr.mxu0 0.0
      %319 = vmatpush2.msra.mxu0 0.0
      %320 = vmatprep.subr.mxu0 0.0
      %321 = vmatpush2.msra.mxu0 0.0
      %322 = vmatprep.subr.mxu0 0.0
      %323 = vmatpush2.msra.mxu0 0.0
      %324 = vmatprep.subr.mxu0 0.0
      %325 = vmatpush2.msra.mxu0 0.0
      %326 = vmatprep.subr.mxu0 0.0
      %327 = vmatpush2.msra.mxu0 0.0
      %328 = vmatprep.mubr.bf16.mxu0 0
      %329 = vmatmul.mubr.bf16.gmra.mxu0 %v256
      %v330 = vpop.f32.mrf.mxu0
      %v331 = vadd.f32 0.0, %v330
      %v332 = vpop.f32.mrf.mxu0
      %v333 = vpop.f32.mrf.mxu0
      %v334 = vadd.f32 0.0, %v333
      %v335 = vpop.f32.mrf.mxu0
      %336 = vmatprep.mubr.bf16.mxu0 0
      %337 = vmatmul.mubr.bf16.gmra.mxu0 %v257
      %v338 = vpop.f32.mrf.mxu0
      %v339 = vadd.f32 0.0, %v338
      %v340 = vpop.f32.mrf.mxu0
      %v341 = vpop.f32.mrf.mxu0
      %v342 = vadd.f32 0.0, %v341
      %v343 = vpop.f32.mrf.mxu0
      %344 = vmatprep.mubr.bf16.mxu0 0
      %345 = vmatmul.mubr.bf16.gmra.mxu0 %v258
      %v346 = vpop.f32.mrf.mxu0
      %v347 = vadd.f32 0.0, %v346
      %v348 = vpop.f32.mrf.mxu0
      %v349 = vpop.f32.mrf.mxu0
      %v350 = vadd.f32 0.0, %v349
      %v351 = vpop.f32.mrf.mxu0
      %352 = vmatprep.mubr.bf16.mxu0 0
      %353 = vmatmul.mubr.bf16.gmra.mxu0 %v259
      %v354 = vpop.f32.mrf.mxu0
      %v355 = vadd.f32 0.0, %v354
      %v356 = vpop.f32.mrf.mxu0
      %v357 = vpop.f32.mrf.mxu0
      %v358 = vadd.f32 0.0, %v357
      %v359 = vpop.f32.mrf.mxu0
      %360 = vdwg.mxu0
      %s361 = scalar_lea.vmem [#allocation2], %s214
      %vm362 = vcmask 523264
      %363 = vst.msk [vmem:[%s361] sm:$0xff] %vm362, %v331
      %364 = vst.msk [vmem:[%s361 + $0x8] sm:$0xff] %vm362, %v334
      %365 = vst.msk [vmem:[%s361 + $0x10] sm:$0xff] %vm362, %v339
      %366 = vst.msk [vmem:[%s361 + $0x18] sm:$0xff] %vm362, %v342
      %367 = vst.msk [vmem:[%s361 + $0x20] sm:$0xff] %vm362, %v347
      %368 = vst.msk [vmem:[%s361 + $0x28] sm:$0xff] %vm362, %v350
      %369 = vst.msk [vmem:[%s361 + $0x30] sm:$0xff] %vm362, %v355
      %370 = vst.msk [vmem:[%s361 + $0x38] sm:$0xff] %vm362, %v358
      %s371 = scalar_lea.vmem %s2, %s212
      %v372 = vld [vmem:[%s371] sm:$0xff]
      %v373 = vld [vmem:[%s371 + $0x8] sm:$0xff]
      %v374 = vld [vmem:[%s371 + $0x10] sm:$0xff]
      %v375 = vld [vmem:[%s371 + $0x18] sm:$0xff]
      %v376 = vld [vmem:[%s371 + $0x20] sm:$0xff]
      %v377 = vld [vmem:[%s371 + $0x28] sm:$0xff]
      %v378 = vld [vmem:[%s371 + $0x30] sm:$0xff]
      %v379 = vld [vmem:[%s371 + $0x38] sm:$0xff]
      %v380 = vadd.f32 %v372, %v331
      %v381 = vadd.f32 %v373, %v334
      %v382 = vadd.f32 %v374, %v339
      %v383 = vadd.f32 %v375, %v342
      %v384 = vadd.f32 %v376, %v347
      %v385 = vadd.f32 %v377, %v350
      %v386 = vadd.f32 %v378, %v355
      %v387 = vadd.f32 %v379, %v358
      %p388 = scmp.eq.s32.totalorder %s17, 1
      %s389 = scalar_select %p388, 0.33333334, 1.0
      %v390 = vstv %s389
      %v391 = vmul.f32 %v380, %v390
      %v392 = vmul.f32 %v381, %v390
      %v393 = vmul.f32 %v382, %v390
      %v394 = vmul.f32 %v383, %v390
      %v395 = vmul.f32 %v384, %v390
      %v396 = vmul.f32 %v385, %v390
      %v397 = vmul.f32 %v386, %v390
      %v398 = vmul.f32 %v387, %v390
      %399 = vst.msk [vmem:[%s371] sm:$0xff] %vm362, %v391
      %400 = vst.msk [vmem:[%s371 + $0x8] sm:$0xff] %vm362, %v392
      %401 = vst.msk [vmem:[%s371 + $0x10] sm:$0xff] %vm362, %v393
      %402 = vst.msk [vmem:[%s371 + $0x18] sm:$0xff] %vm362, %v394
      %403 = vst.msk [vmem:[%s371 + $0x20] sm:$0xff] %vm362, %v395
      %404 = vst.msk [vmem:[%s371 + $0x28] sm:$0xff] %vm362, %v396
      %405 = vst.msk [vmem:[%s371 + $0x30] sm:$0xff] %vm362, %v397
      %406 = vst.msk [vmem:[%s371 + $0x38] sm:$0xff] %vm362, %v398
      // Predicated region
      $region33: #{tpu_custom_call.1} parent=27 // pred_check
        %p407 = pneg %p85
      $region34: #{tpu_custom_call.1} parent=27 // pred_check_branch
        %409 = sbr.rel (%p407) target = $region36
      $region35: #{tpu_custom_call.1} parent=27 // pred_region
        _
      $region36: #{tpu_custom_call.1} parent=27 // pred_fallthru
        _
      // Predicated region
      $region37: #{tpu_custom_call.1} parent=27 // pred_check
        %p410 = pneg %p85
      $region38: #{tpu_custom_call.1} parent=27 // pred_check_branch
        %412 = sbr.rel (%p410) target = $region40
      $region39: #{tpu_custom_call.1} parent=27 // pred_region
        _
      $region40: #{tpu_custom_call.1} parent=27 // pred_fallthru
        _
    $region28: #{tpu_custom_call.1} parent=5 // pred_fallthru
      _
    %p413 = scmp.le.s32.totalorder 2, %s8
    // Predicated region
    $region41: #{tpu_custom_call.1} parent=5 // pred_check
      %p414 = pneg %p413
    $region42: #{tpu_custom_call.1} parent=5 // pred_check_branch
      %416 = sbr.rel (%p414) target = $region44
    $region43: #{tpu_custom_call.1} parent=5 // pred_region
      %s417 = ssub.s32 %s8, 2
    $region44: #{tpu_custom_call.1} parent=5 // pred_fallthru
      _
  $region6: #{tpu_custom_call.1} parent=0 // loop_footer
    %s12 = sadd.s32 1, %s8
  $region7: #{tpu_custom_call.1} parent=0 // loop_footer_branch
    %7 = sbr.rel target = $region3
  $region8: #{tpu_custom_call.1} parent=0 // loop_exit
    _

</llo_original>
